<compile_context>
chip_gen: v7x
topology: tpu7x:2x2x1
jax: 0.10.0
libtpu: 0.0.40
codegen_flags: <defaults>
</compile_context>

<pallas_src>
import jax
import jax.numpy as jnp
from jax import lax
from jax.experimental import pallas as pl
from jax.experimental.pallas import tpu as pltpu


# ---------------------------------------------------------------------------
# Fused kernel: logits = x_cls @ W^T + b ; out = log_softmax(logits, axis=-1)
# ---------------------------------------------------------------------------
def _nsp_kernel(x_ref, w_ref, b_ref, o_ref):
    x = x_ref[...]                      # (TB, H)  CLS-token activations (native dtype)
    w = w_ref[...]                      # (2, H)   nn.Linear weight (out, in), same dtype
    # contract H on both sides -> (TB, 2) in f32; avoids an in-kernel w.T (XLU)
    logits = lax.dot_general(
        x, w, (((1,), (1,)), ((), ())),
        preferred_element_type=jnp.float32) + b_ref[...]
    # numerically-stable log-softmax over the class axis, all in f32
    m = jnp.max(logits, axis=-1, keepdims=True)
    z = logits - m
    lse = jnp.log(jnp.sum(jnp.exp(z), axis=-1, keepdims=True))
    o_ref[...] = (z - lse).astype(o_ref.dtype)


def _tensorcores_per_chip():
    """Best-effort detection of v7x (2 TCs/chip); defaults to 1."""
    try:
        kind = jax.devices()[0].device_kind.lower()
        if "v7" in kind or "7x" in kind or "tpu7" in kind:
            return 2
    except Exception:  # pragma: no cover - detection is advisory only
        pass
    return 1


def next_sentence_prediction(x, w, b, *, tb_cap=None):
    """x: (B, L, H), w: (2, H), b: (2,)  ->  (B, 2) log-probabilities (x.dtype)."""
    B, L, H = x.shape
    n_cls = w.shape[0]
    dtype = x.dtype
    itemsize = jnp.dtype(dtype).itemsize

    # --- get the CLS rows in front of the kernel with minimal HBM traffic ----
    direct = (H % 128 == 0) and (B % 8 == 0)
    if direct:
        # free, contiguous metadata reshape; BlockSpec column-block 0 == x[:, 0, :]
        x_in = x.reshape(B, L * H)
        Bp = B
    else:
        # fallback (small H or ragged B): materialize the CLS slice (B*H copy),
        # pad rows to a multiple of 8 so the tiled / sublane-aligned path holds.
        x_cls = x[:, 0, :]
        Bp = -(-B // 8) * 8
        if Bp != B:
            x_cls = jnp.pad(x_cls, ((0, Bp - B), (0, 0)))
        x_in = x_cls

    w_in = w.astype(dtype)                          # tiny (2*H); keep MXU dtypes matched
    b2d = b.reshape(1, n_cls).astype(jnp.float32)   # bias added on the f32 logits

    # --- batch tile: as big as the VMEM budget allows (amortize step overhead) ---
    vmem_budget = 12 * 1024 * 1024                  # double-buffered x-block, v5e-safe
    cap = max(8, min(2048, (vmem_budget // (2 * H * itemsize)) // 8 * 8))
    if tb_cap is not None:                          # test hook to force the tiled path
        cap = min(cap, max(8, (tb_cap // 8) * 8))
    tb = max(8, min(Bp, cap) // 8 * 8)
    # v7x only: keep >= 2 grid steps so "parallel" shards over both TensorCores
    if _tensorcores_per_chip() >= 2 and Bp >= 16:
        tb = min(tb, max(8, (Bp // 2) // 8 * 8))
    while Bp % tb != 0:
        tb -= 8
    grid = (Bp // tb,)

    cost = pl.CostEstimate(
        flops=2 * Bp * H * n_cls + 6 * Bp * n_cls,
        transcendentals=2 * Bp * n_cls,             # exp + log
        bytes_accessed=itemsize * (Bp * H + n_cls * H + Bp * n_cls) + 4 * n_cls,
    )

    out = pl.pallas_call(
        _nsp_kernel,
        out_shape=jax.ShapeDtypeStruct((Bp, n_cls), dtype),
        grid=grid,
        in_specs=[
            pl.BlockSpec((tb, H), lambda i: (i, 0)),     # CLS rows (col-block 0)
            pl.BlockSpec((n_cls, H), lambda i: (0, 0)),  # weight (whole, resident)
            pl.BlockSpec((1, n_cls), lambda i: (0, 0)),  # bias   (whole, resident)
        ],
        out_specs=pl.BlockSpec((tb, n_cls), lambda i: (i, 0)),
        compiler_params=pltpu.CompilerParams(
            dimension_semantics=("parallel",),
            vmem_limit_bytes=32 * 1024 * 1024,
        ),
        cost_estimate=cost,
    )(x_in, w_in, b2d)

    return out[:B] if Bp != B else out


# ---------------------------------------------------------------------------
# Deterministic parameter init (matches nn.Linear(hidden, 2) default init)
# ---------------------------------------------------------------------------
def init_params(key, hidden, n_cls=2):
    kw, kb = jax.random.split(key)
    bound = 1.0 / (hidden ** 0.5)
    w = jax.random.uniform(kw, (n_cls, hidden), jnp.float32, -bound, bound)
    b = jax.random.uniform(kb, (n_cls,), jnp.float32, -bound, bound)
    return w, b


# ---------------------------------------------------------------------------
# Pure-JAX reference (same math) for correctness checks.
# ---------------------------------------------------------------------------
def reference(x, w, b):
    logits = x[:, 0, :].astype(jnp.float32) @ w.astype(jnp.float32).T + b
    return jax.nn.log_softmax(logits, axis=-1)


if __name__ == "__main__":
    root = jax.random.PRNGKey(0)
    k1, k2, k3, k4 = jax.random.split(root, 4)

    # ---- test 1: tiny module-consistent shapes (fallback path: H%128!=0, B%8!=0)
    B, L, H = 2, 8, 32
    x = jax.random.normal(k1, (B, L, H), jnp.float32)
    w, b = init_params(k2, H)
    out = jax.block_until_ready(next_sentence_prediction(x, w, b))
    ref = reference(x, w, b)
    assert out.shape == (B, 2)
    assert jnp.allclose(out, ref, atol=1e-5, rtol=1e-5), float(
        jnp.max(jnp.abs(out - ref)))

    # ---- test 2: direct-DMA path (H%128==0, B%8==0), bf16 activations, tiled grid
    B, L, H = 32, 8, 128
    x2 = jax.random.normal(k3, (B, L, H), jnp.float32)
    w2, b2 = init_params(k4, H)
    x2b = x2.astype(jnp.bfloat16)
    out2 = jax.block_until_ready(
        next_sentence_prediction(x2b, w2, b2, tb_cap=8))      # force a 4-step grid
    ref2 = reference(x2b.astype(jnp.float32),
                     w2.astype(jnp.bfloat16).astype(jnp.float32), b2)
    assert out2.shape == (B, 2) and out2.dtype == jnp.bfloat16
    assert jnp.allclose(out2.astype(jnp.float32), ref2, atol=5e-2, rtol=5e-2), float(
        jnp.max(jnp.abs(out2.astype(jnp.float32) - ref2)))

    # ---- test 3: direct-DMA path with f32, default tile selection
    out3 = jax.block_until_ready(next_sentence_prediction(x2, w2, b2))
    ref3 = reference(x2, w2, b2)
    assert jnp.allclose(out3, ref3, atol=1e-5, rtol=1e-5), float(
        jnp.max(jnp.abs(out3 - ref3)))

    print("KERNEL_OK")
</pallas_src>

<mosaic_0001>
module attributes {stable_mosaic.version = 11 : i64} {
  func.func @_nsp_kernel(%arg0: i32, %arg1: memref<8x32xf32, #tpu.memory_space<vmem>>, %arg2: memref<2x32xf32, #tpu.memory_space<vmem>>, %arg3: memref<1x2xf32, #tpu.memory_space<vmem>>, %arg4: memref<8x2xf32, #tpu.memory_space<vmem>>) attributes {dimension_semantics = [#tpu.dimension_semantics<parallel>], iteration_bounds = array<i64: 1>, scalar_prefetch = 0 : i64, scratch_operands = 0 : i64, tpu.core_type = #tpu.core_type<tc>, window_params = [{transform_indices = @transform_0, window_bounds = array<i64: 8, 32>}, {pipeline_mode = #tpu.pipeline_mode<synchronous>, transform_indices = @transform_1, window_bounds = array<i64: 2, 32>}, {pipeline_mode = #tpu.pipeline_mode<synchronous>, transform_indices = @transform_2, window_bounds = array<i64: 1, 2>}, {transform_indices = @transform_3, window_bounds = array<i64: 8, 2>}]} {
    %c0 = arith.constant 0 : index
    %c0_0 = arith.constant 0 : index
    %0 = vector.load %arg1[%c0, %c0_0] : memref<8x32xf32, #tpu.memory_space<vmem>>, vector<8x32xf32>
    %c0_1 = arith.constant 0 : index
    %c0_2 = arith.constant 0 : index
    %1 = vector.load %arg2[%c0_1, %c0_2] : memref<2x32xf32, #tpu.memory_space<vmem>>, vector<2x32xf32>
    %cst = arith.constant dense<0.000000e+00> : vector<8x2xf32>
    %2 = tpu.matmul %0, %1, %cst {dimension_numbers = #tpu.dot_dimension_numbers<[1], [1], [0], [0], [0, 0, 1, 0], [], []>} : vector<8x32xf32>, vector<2x32xf32>, vector<8x2xf32> -> vector<8x2xf32>
    %c0_3 = arith.constant 0 : index
    %c0_4 = arith.constant 0 : index
    %3 = vector.load %arg3[%c0_3, %c0_4] : memref<1x2xf32, #tpu.memory_space<vmem>>, vector<1x2xf32>
    %4 = vector.broadcast %3 : vector<1x2xf32> to vector<8x2xf32>
    %5 = arith.addf %2, %4 : vector<8x2xf32>
    %cst_5 = arith.constant dense<0xFF800000> : vector<8xf32>
    %6 = vector.multi_reduction <maximumf>, %5, %cst_5 [1] : vector<8x2xf32> to vector<8xf32>
    %7 = vector.shape_cast %6 : vector<8xf32> to vector<8x1xf32>
    %8 = vector.broadcast %7 : vector<8x1xf32> to vector<8x2xf32>
    %9 = arith.subf %5, %8 : vector<8x2xf32>
    %10 = math.exp %9 : vector<8x2xf32>
    %cst_6 = arith.constant dense<0.000000e+00> : vector<8xf32>
    %11 = vector.multi_reduction <add>, %10, %cst_6 [1] : vector<8x2xf32> to vector<8xf32>
    %12 = vector.shape_cast %11 : vector<8xf32> to vector<8x1xf32>
    %13 = math.log %12 : vector<8x1xf32>
    %14 = vector.broadcast %13 : vector<8x1xf32> to vector<8x2xf32>
    %15 = arith.subf %9, %14 : vector<8x2xf32>
    %c0_7 = arith.constant 0 : index
    %c0_8 = arith.constant 0 : index
    %16 = vector.load %arg4[%c0_7, %c0_8] : memref<8x2xf32, #tpu.memory_space<vmem>>, vector<8x2xf32>
    tpu.vector_store %arg4[%c0_7, %c0_8], %15 {strides = array<i32>} : memref<8x2xf32, #tpu.memory_space<vmem>>, vector<8x2xf32>,
    return
  }
  func.func @transform_0(%arg0: i32) -> (i32, i32) {
    %c0_i32 = arith.constant 0 : i32
    %c0_i32_0 = arith.constant 0 : i32
    return %arg0, %c0_i32 : i32, i32
  }
  func.func @transform_1(%arg0: i32) -> (i32, i32) {
    %c0_i32 = arith.constant 0 : i32
    %c0_i32_0 = arith.constant 0 : i32
    %c0_i32_1 = arith.constant 0 : i32
    return %c0_i32, %c0_i32_0 : i32, i32
  }
  func.func @transform_2(%arg0: i32) -> (i32, i32) {
    %c0_i32 = arith.constant 0 : i32
    %c0_i32_0 = arith.constant 0 : i32
    %c0_i32_1 = arith.constant 0 : i32
    return %c0_i32, %c0_i32_0 : i32, i32
  }
  func.func @transform_3(%arg0: i32) -> (i32, i32) {
    %c0_i32 = arith.constant 0 : i32
    %c0_i32_0 = arith.constant 0 : i32
    return %arg0, %c0_i32 : i32, i32
  }
}

</mosaic_0001>

<llo_original>
// kernel: tpu_custom_call.1
$region0: #{tpu_custom_call.1}
  #allocation0 [shape = 'u32[]', space=smem, size = 0x4, offset = 0x4, fixed_abs, tag = 'smem constant byte address 0x4 - core index']
  #allocation1 [shape = 'u32[144,128]{1,0:T(1,128)}', space=vmem, size = 0x12000, scoped, tag = 'internal scratch']
  %s0 = inlined_call_operand.hbm [shape: f32[8,32], index: 0, kind: input, shape index: {}]
  %s1 = inlined_call_operand.vmem [shape: f32[2,32], index: 1, kind: input, shape index: {}]
  %s2 = inlined_call_operand.vmem [shape: f32[1,2], index: 2, kind: input, shape index: {}]
  %s3 = inlined_call_operand.vmem [shape: f32[8,2], index: 3, kind: output, shape index: {}]
  %s4 = sld [smem:[#allocation0]]
  $region26: #{tpu_custom_call.1} parent=0
    _
  %s6 = ssub.s32 1, %s4
  %s7 = scalar_select 0, %s6, %s4
  $region1: #{tpu_custom_call.1} parent=0
    #allocation2 [shape = 'u8[4096]{0}', space=vmem, size = 0x1000, scoped, tag = 'input window, operand 0, single buffered']
    #allocation3 [shape = 's32[1]{0}', space=sflag, size = 0x4, scoped, tag = 'scoped memory for tpu_custom_call.1']
    %8 = vsyncpa [#allocation3], 0
    // Predicated region
    $region2: #{tpu_custom_call.1} parent=1 // pred_check
      _
    $region3: #{tpu_custom_call.1} parent=1 // pred_check_branch
      %10 = sbr.rel (0) target = $region5
    $region4: #{tpu_custom_call.1} parent=1 // pred_region
      %s12 = ssub.s32 128, 128
      %13 = vsyncadd [#allocation3], %s12
      %s15 = sshll.u32 [#allocation2], 4
      %s16 = int_to_ptr.vmem [resolvable:$true] %s15
      %18 = dma.hbm_to_vmem [thread:$0]  %s0, 128, %s16, [#allocation3]
    $region5: #{tpu_custom_call.1} parent=1 // pred_fallthru
      _
    // Predicated region
    $region6: #{tpu_custom_call.1} parent=1 // pred_check
      _
    $region7: #{tpu_custom_call.1} parent=1 // pred_check_branch
      %20 = sbr.rel (0) target = $region9
    $region8: #{tpu_custom_call.1} parent=1 // pred_region
      _
    $region9: #{tpu_custom_call.1} parent=1 // pred_fallthru
      _
    // Predicated region
    $region10: #{tpu_custom_call.1} parent=1 // pred_check
      _
    $region11: #{tpu_custom_call.1} parent=1 // pred_check_branch
      %22 = sbr.rel (0) target = $region13
    $region12: #{tpu_custom_call.1} parent=1 // pred_region
      _
    $region13: #{tpu_custom_call.1} parent=1 // pred_fallthru
      _
    // Predicated region
    $region14: #{tpu_custom_call.1} parent=1 // pred_check
      _
    $region15: #{tpu_custom_call.1} parent=1 // pred_check_branch
      %24 = sbr.rel (0) target = $region17
    $region16: #{tpu_custom_call.1} parent=1 // pred_region
      %25 = dma.done [#allocation3], 128
    $region17: #{tpu_custom_call.1} parent=1 // pred_fallthru
      _
    %v26 = vld [vmem:[#allocation2] sm:$0xff]
    %v27 = vld [vmem:[%s1] sm:$0x3]
    %v28 = vld [vmem:[%s2] sm:$0x1]
    %v30 = vlaneseq
    %v31 = vshrl.u32 %v30, 7
    %v32 = vsub.s32 0, %v31
    %v33 = vrot.slane %v28, %v32
    %vm35 = vcmask 261120
    %v37 = vsel %vm35, %v26, 0
    %v40 = vsel %vm35, %v27, 0
    %42 = vmatprep.subr.mxu0 0.0
    %43 = vmatpush1.xpose.msra.mxu0 %v40
    %44 = vmatprep.subr.mxu0 0.0
    %45 = vmatpush1.xpose.msra.mxu0 0.0
    %46 = vmatprep.subr.mxu0 0.0
    %47 = vmatpush1.xpose.msra.mxu0 0.0
    %48 = vmatprep.subr.mxu0 0.0
    %49 = vmatpush1.xpose.msra.mxu0 0.0
    %50 = vmatprep.subr.mxu0 0.0
    %51 = vmatpush1.xpose.msra.mxu0 0.0
    %52 = vmatprep.subr.mxu0 0.0
    %53 = vmatpush1.xpose.msra.mxu0 0.0
    %54 = vmatprep.subr.mxu0 0.0
    %55 = vmatpush1.xpose.msra.mxu0 0.0
    %56 = vmatprep.subr.mxu0 0.0
    %57 = vmatpush1.xpose.msra.mxu0 0.0
    %58 = vmatprep.subr.mxu0 0.0
    %59 = vmatpush1.xpose.msra.mxu0 0.0
    %60 = vmatprep.subr.mxu0 0.0
    %61 = vmatpush1.xpose.msra.mxu0 0.0
    %62 = vmatprep.subr.mxu0 0.0
    %63 = vmatpush1.xpose.msra.mxu0 0.0
    %64 = vmatprep.subr.mxu0 0.0
    %65 = vmatpush1.xpose.msra.mxu0 0.0
    %66 = vmatprep.subr.mxu0 0.0
    %67 = vmatpush1.xpose.msra.mxu0 0.0
    %68 = vmatprep.subr.mxu0 0.0
    %69 = vmatpush1.xpose.msra.mxu0 0.0
    %70 = vmatprep.subr.mxu0 0.0
    %71 = vmatpush1.xpose.msra.mxu0 0.0
    %72 = vmatprep.subr.mxu0 0.0
    %73 = vmatpush1.xpose.msra.mxu0 0.0
    %74 = vmatprep.subr.mxu0 0.0
    %75 = vmatpush1.xpose.msra.mxu0 0.0
    %76 = vmatprep.subr.mxu0 0.0
    %77 = vmatpush1.xpose.msra.mxu0 0.0
    %78 = vmatprep.subr.mxu0 0.0
    %79 = vmatpush1.xpose.msra.mxu0 0.0
    %80 = vmatprep.subr.mxu0 0.0
    %81 = vmatpush1.xpose.msra.mxu0 0.0
    %82 = vmatprep.subr.mxu0 0.0
    %83 = vmatpush1.xpose.msra.mxu0 0.0
    %84 = vmatprep.subr.mxu0 0.0
    %85 = vmatpush1.xpose.msra.mxu0 0.0
    %86 = vmatprep.subr.mxu0 0.0
    %87 = vmatpush1.xpose.msra.mxu0 0.0
    %88 = vmatprep.subr.mxu0 0.0
    %89 = vmatpush1.xpose.msra.mxu0 0.0
    %90 = vmatprep.subr.mxu0 0.0
    %91 = vmatpush1.xpose.msra.mxu0 0.0
    %92 = vmatprep.subr.mxu0 0.0
    %93 = vmatpush1.xpose.msra.mxu0 0.0
    %94 = vmatprep.subr.mxu0 0.0
    %95 = vmatpush1.xpose.msra.mxu0 0.0
    %96 = vmatprep.subr.mxu0 0.0
    %97 = vmatpush1.xpose.msra.mxu0 0.0
    %98 = vmatprep.subr.mxu0 0.0
    %99 = vmatpush1.xpose.msra.mxu0 0.0
    %100 = vmatprep.subr.mxu0 0.0
    %101 = vmatpush1.xpose.msra.mxu0 0.0
    %102 = vmatprep.subr.mxu0 0.0
    %103 = vmatpush1.xpose.msra.mxu0 0.0
    %104 = vmatprep.subr.mxu0 0.0
    %105 = vmatpush1.xpose.msra.mxu0 0.0
    %106 = vmatprep.mubr.f32.mxu0 0.0
    %107 = vmatmul.mubr.f32.gmra.mrb[0].mxu0 %v37
    %v108 = vpop.f32.mrb[0].mxu0
    %v109 = vadd.f32 %v33, %v108
    %v110 = vpop.f32.mrb[0].mxu0
    %111 = vdwg.mxu0
    %vm112 = vcmask 15360
    %v113 = vsel %vm112, %v109, -inf
    %114 = vmax.xlane.f32.xlu0 %v113
    %v115 = vpop.xlane.xlu0 %114
    %v116 = vsub.f32 %v109, %v115
    %v117 = vmul.f32 %v116, 1.442695
    %v118 = vpow.pop %v117
    %v119 = vsel %vm112, %v118, 0.0
    %120 = vadd.xlane.f32.xlu0 %v119
    %v121 = vpop.xlane.xlu0 %120
    %v122 = vlog2.pop %v121
    %v123 = vmul.f32 %v122, 0.6931472
    %v124 = vsub.f32 %v116, %v123
    %125 = vst.msk [vmem:[%s3] sm:$0xff] %vm112, %v124
    // Predicated region
    $region18: #{tpu_custom_call.1} parent=1 // pred_check
      _
    $region19: #{tpu_custom_call.1} parent=1 // pred_check_branch
      %127 = sbr.rel (0) target = $region21
    $region20: #{tpu_custom_call.1} parent=1 // pred_region
      _
    $region21: #{tpu_custom_call.1} parent=1 // pred_fallthru
      _
    // Predicated region
    $region22: #{tpu_custom_call.1} parent=1 // pred_check
      _
    $region23: #{tpu_custom_call.1} parent=1 // pred_check_branch
      %129 = sbr.rel (0) target = $region25
    $region24: #{tpu_custom_call.1} parent=1 // pred_region
      _
    $region25: #{tpu_custom_call.1} parent=1 // pred_fallthru
      _
    %130 = vsyncpa [#allocation3], 1

</llo_original>
